<compile_context>
chip_gen: v7x
topology: tpu7x:2x2x1
jax: 0.10.0
libtpu: 0.0.40
codegen_flags: <defaults>
</compile_context>

<pallas_src>
import jax
import jax.numpy as jnp
from jax.experimental import pallas as pl
from jax.experimental.pallas import tpu as pltpu


def _fbn_row_affine_kernel(x_ref, ss_ref, o_ref):
    # ss_ref: (tile_rows, 2) f32; column 0 = scale, column 1 = shift.
    # Broadcast across the lane axis -> out = x * scale + shift.
    x = x_ref[...].astype(jnp.float32)
    ss = ss_ref[...]
    o_ref[...] = (x * ss[:, 0:1] + ss[:, 1:2]).astype(o_ref.dtype)


def _fbn_col_affine_kernel(x_ref, ss_ref, o_ref):
    # ss_ref: (2, tile_cols) f32; row 0 = scale, row 1 = shift.
    # Broadcast across the sublane axis -> out = x * scale + shift.
    x = x_ref[...].astype(jnp.float32)
    ss = ss_ref[...]
    o_ref[...] = (x * ss[0:1, :] + ss[1:2, :]).astype(o_ref.dtype)


def _select_budgets():
    """Per-generation (max_block_bytes, vmem_limit_bytes).

    v7x: faster HBM (~3.2 TB/s) makes the fixed per-step overhead a bigger tax,
    so use ~6 MiB blocks, but respect its 64 MiB physical VMEM (limit 40 MiB).
    v5e/v6e: ~4 MiB blocks, 32 MiB scoped VMEM (128 MiB physical, plenty).
    """
    try:
        kind = jax.devices()[0].device_kind.lower()
    except Exception:
        kind = ""
    if "v7" in kind:
        return 6 * 1024 * 1024, 40 * 1024 * 1024
    return 4 * 1024 * 1024, 32 * 1024 * 1024


def _choose_tiles(rows, cols, itemsize, *, max_block_bytes):
    """Lane-first block sizing: wide-and-short tiles of ~max_block_bytes."""
    row_align = max(8, 32 // itemsize)   # 8 f32 / 16 bf16 / 32 int8 sublanes
    lane = 128

    # 1) Lane (last) axis first: full extent when it fits a minimal-height
    #    block (always layout-legal), otherwise the largest 128-multiple.
    if cols <= lane or cols * itemsize * row_align <= max_block_bytes:
        tile_cols = cols
    else:
        tile_cols = (max_block_bytes // (row_align * itemsize)) // lane * lane
        tile_cols = max(lane, min(tile_cols, pl.cdiv(cols, lane) * lane))

    # 2) Sublane axis: fill the remaining budget, capped at 1024 rows so the
    #    128-lane-padded scale/shift tiles stay tiny in VMEM.
    bytes_per_row = max(1, tile_cols * itemsize)
    tile_rows = (max_block_bytes // bytes_per_row) // row_align * row_align
    tile_rows = max(row_align, min(tile_rows, 1024))
    if rows <= row_align:
        tile_rows = rows                      # full extent: always legal
    else:
        tile_rows = min(tile_rows, pl.cdiv(rows, row_align) * row_align)

    # 3) Megacore: if everything fits in a single block, split the larger axis
    #    so both v7x TensorCores get work (free on single-core chips).
    if pl.cdiv(rows, tile_rows) == 1 and pl.cdiv(cols, tile_cols) == 1:
        if rows >= 2 * row_align:
            tile_rows = pl.cdiv(pl.cdiv(rows, 2), row_align) * row_align
        elif cols >= 2 * lane:
            tile_cols = pl.cdiv(pl.cdiv(cols, 2), lane) * lane

    return tile_rows, tile_cols


def frozen_batch_norm_2d(x, weight, bias, running_mean, running_var, *,
                         eps=1e-5, max_block_bytes=None, vmem_limit_bytes=None,
                         small_spatial_threshold=512):
    """x: NCHW array; params: (C,) arrays. Returns NCHW array (same dtype)."""
    n, c, h, w = x.shape
    hw = h * w
    itemsize = jnp.dtype(x.dtype).itemsize

    auto_block, auto_vmem = _select_budgets()
    if max_block_bytes is None:
        max_block_bytes = auto_block
    if vmem_limit_bytes is None:
        vmem_limit_bytes = auto_vmem

    # Fold the frozen statistics into a single affine once (C-sized, negligible).
    w32 = weight.astype(jnp.float32)
    b32 = bias.astype(jnp.float32)
    rm32 = running_mean.astype(jnp.float32)
    rv32 = running_var.astype(jnp.float32)
    scale = w32 * jax.lax.rsqrt(rv32 + jnp.float32(eps))   # (C,)
    shift = b32 - rm32 * scale                              # (C,)

    col_broadcast = hw < small_spatial_threshold
    if col_broadcast:
        # Small-spatial fallback: lane axis = C*H*W (large & dense -> unmasked
        # vst); affine expanded along C*H*W once (independent of N).
        rows, cols = n, c * hw
        x2d = x.reshape(rows, cols)                          # zero-copy view
        ss = jnp.stack([jnp.repeat(scale, hw),
                        jnp.repeat(shift, hw)], axis=0)      # (2, C*H*W) f32
    else:
        # Large-spatial layout: lane axis = H*W; per-row affine for N*C rows,
        # packed (scale|shift) so each row-tile needs one tiny DMA, not two.
        rows, cols = n * c, hw
        x2d = x.reshape(rows, cols)                          # zero-copy view
        ss = jnp.stack([jnp.tile(scale, n),
                        jnp.tile(shift, n)], axis=1)         # (N*C, 2) f32

    tile_rows, tile_cols = _choose_tiles(rows, cols, itemsize,
                                         max_block_bytes=max_block_bytes)
    grid = (pl.cdiv(rows, tile_rows), pl.cdiv(cols, tile_cols))

    if col_broadcast:
        kernel = _fbn_col_affine_kernel
        ss_spec = pl.BlockSpec((2, tile_cols), lambda i, j: (0, j))
    else:
        kernel = _fbn_row_affine_kernel
        # index_map depends only on i; j is innermost, so ss stays resident
        # across the whole column sweep of a row-tile.
        ss_spec = pl.BlockSpec((tile_rows, 2), lambda i, j: (i, 0))

    data_bytes = rows * cols * itemsize
    cost = pl.CostEstimate(
        flops=2 * rows * cols,
        transcendentals=0,
        bytes_accessed=2 * data_bytes + ss.size * 4,
    )

    out2d = pl.pallas_call(
        kernel,
        out_shape=jax.ShapeDtypeStruct((rows, cols), x.dtype),
        grid_spec=pl.GridSpec(
            grid=grid,
            in_specs=[
                pl.BlockSpec((tile_rows, tile_cols), lambda i, j: (i, j)),
                ss_spec,
            ],
            out_specs=pl.BlockSpec((tile_rows, tile_cols), lambda i, j: (i, j)),
        ),
        compiler_params=pltpu.CompilerParams(
            dimension_semantics=("parallel", "parallel"),
            vmem_limit_bytes=vmem_limit_bytes,
        ),
        cost_estimate=cost,
    )(x2d, ss)

    # Zero-copy back to NCHW.
    return out2d.reshape(n, c, h, w)


if __name__ == "__main__":
    key = jax.random.PRNGKey(0)
    eps = 1e-5

    def reference(x, weight, bias, rm, rv):
        ch = x.shape[1]
        scale = (weight * jax.lax.rsqrt(rv + eps)).reshape(1, ch, 1, 1)
        shift = bias.reshape(1, ch, 1, 1) - rm.reshape(1, ch, 1, 1) * scale
        return x * scale + shift

    # Case 1 exercises the small-spatial (lane = C*H*W) path; case 2 the
    # large-spatial (lane = H*W) path.
    cases = [(2, 4, 16, 16), (2, 3, 32, 32)]
    for (n_batch, n_ch, hh, ww) in cases:
        key, k_x, k_w, k_b, k_rm, k_rv = jax.random.split(key, 6)
        x = jax.random.normal(k_x, (n_batch, n_ch, hh, ww), dtype=jnp.float32)

        weight = jnp.ones((n_ch,), jnp.float32) + 0.1 * jax.random.normal(k_w, (n_ch,))
        bias = 0.1 * jax.random.normal(k_b, (n_ch,))
        running_mean = 0.5 * jax.random.normal(k_rm, (n_ch,))
        running_var = jnp.abs(jax.random.normal(k_rv, (n_ch,))) + 0.5

        out = frozen_batch_norm_2d(x, weight, bias, running_mean, running_var, eps=eps)
        out = jax.block_until_ready(out)
        ref = reference(x, weight, bias, running_mean, running_var)

        assert out.shape == x.shape and out.dtype == x.dtype
        assert jnp.allclose(out, ref, atol=1e-5, rtol=1e-5)

    print("KERNEL_OK")
</pallas_src>

<mosaic_0001>
module attributes {stable_mosaic.version = 11 : i64} {
  func.func @_fbn_col_affine_kernel(%arg0: i32, %arg1: i32, %arg2: memref<2x512xf32, #tpu.memory_space<vmem>>, %arg3: memref<2x512xf32, #tpu.memory_space<vmem>>, %arg4: memref<2x512xf32, #tpu.memory_space<vmem>>) attributes {dimension_semantics = [#tpu.dimension_semantics<parallel>, #tpu.dimension_semantics<parallel>], iteration_bounds = array<i64: 1, 2>, scalar_prefetch = 0 : i64, scratch_operands = 0 : i64, tpu.core_type = #tpu.core_type<tc>, window_params = [{transform_indices = @transform_0, window_bounds = array<i64: 2, 512>}, {transform_indices = @transform_1, window_bounds = array<i64: 2, 512>}, {transform_indices = @transform_2, window_bounds = array<i64: 2, 512>}]} {
    %c0 = arith.constant 0 : index
    %c0_0 = arith.constant 0 : index
    %0 = vector.load %arg2[%c0, %c0_0] : memref<2x512xf32, #tpu.memory_space<vmem>>, vector<2x512xf32>
    %c0_1 = arith.constant 0 : index
    %c0_2 = arith.constant 0 : index
    %1 = vector.load %arg3[%c0_1, %c0_2] : memref<2x512xf32, #tpu.memory_space<vmem>>, vector<2x512xf32>
    %2 = vector.extract_strided_slice %1 {offsets = [0, 0], sizes = [1, 512], strides = [1, 1]} : vector<2x512xf32> to vector<1x512xf32>
    %3 = vector.broadcast %2 : vector<1x512xf32> to vector<2x512xf32>
    %4 = arith.mulf %0, %3 : vector<2x512xf32>
    %5 = vector.extract_strided_slice %1 {offsets = [1, 0], sizes = [1, 512], strides = [1, 1]} : vector<2x512xf32> to vector<1x512xf32>
    %6 = vector.broadcast %5 : vector<1x512xf32> to vector<2x512xf32>
    %7 = arith.addf %4, %6 : vector<2x512xf32>
    %c0_3 = arith.constant 0 : index
    %c0_4 = arith.constant 0 : index
    %8 = vector.load %arg4[%c0_3, %c0_4] : memref<2x512xf32, #tpu.memory_space<vmem>>, vector<2x512xf32>
    tpu.vector_store %arg4[%c0_3, %c0_4], %7 {strides = array<i32>} : memref<2x512xf32, #tpu.memory_space<vmem>>, vector<2x512xf32>,
    return
  }
  func.func @transform_0(%arg0: i32, %arg1: i32) -> (i32, i32) {
    %c0_i32 = arith.constant 0 : i32
    return %arg0, %arg1 : i32, i32
  }
  func.func @transform_1(%arg0: i32, %arg1: i32) -> (i32, i32) {
    %c0_i32 = arith.constant 0 : i32
    %c0_i32_0 = arith.constant 0 : i32
    return %c0_i32, %arg1 : i32, i32
  }
  func.func @transform_2(%arg0: i32, %arg1: i32) -> (i32, i32) {
    %c0_i32 = arith.constant 0 : i32
    return %arg0, %arg1 : i32, i32
  }
}

</mosaic_0001>

<llo_original>
// kernel: tpu_custom_call.1
$region0: #{tpu_custom_call.1}
  #allocation0 [shape = 'u32[]', space=smem, size = 0x4, offset = 0x4, fixed_abs, tag = 'smem constant byte address 0x4 - core index']
  #allocation1 [shape = 'u32[144,128]{1,0:T(1,128)}', space=vmem, size = 0x12000, scoped, tag = 'internal scratch']
  %s0 = inlined_call_operand.hbm [shape: f32[2,1024], index: 0, kind: input, shape index: {}]
  %s1 = inlined_call_operand.hbm [shape: f32[2,1024], index: 1, kind: input, shape index: {}]
  %s2 = inlined_call_operand.hbm [shape: f32[2,1024], index: 2, kind: output, shape index: {}]
  %s3 = sld [smem:[#allocation0]]
  $region49: #{tpu_custom_call.1} parent=0
    _
  %s5 = ssub.s32 1, %s3
  %s6 = scalar_select 0, %s5, %s3
  $region1: #{tpu_custom_call.1} parent=0
    #allocation2 [shape = 'u8[8192]{0}', space=vmem, size = 0x2000, scoped, tag = 'input window, operand 0']
    #allocation3 [shape = 's32[2]{0}', space=sflag, size = 0x8, scoped, tag = 'scoped memory for tpu_custom_call.1']
    #allocation4 [shape = 's32[2]{0}', space=sflag, size = 0x8, scoped, tag = 'scoped memory for tpu_custom_call.1']
    #allocation5 [shape = 'u8[8192]{0}', space=vmem, size = 0x2000, scoped, tag = 'input window, operand 1']
    #allocation6 [shape = 's32[2]{0}', space=sflag, size = 0x8, scoped, tag = 'scoped memory for tpu_custom_call.1']
    #allocation7 [shape = 'u8[8192]{0}', space=vmem, size = 0x2000, scoped, tag = 'output window, operand 0']
    %7 = vsyncpa [#allocation3], 0
    %s8 = scalar_lea.sflag [#allocation3], 1
    %9 = vsyncpa %s8, 0
    %10 = vsyncpa [#allocation6], 0
    %s11 = scalar_lea.sflag [#allocation6], 1
    %12 = vsyncpa %s11, 0
    %13 = vsyncpa [#allocation4], 0
    %s14 = scalar_lea.sflag [#allocation4], 1
    %15 = vsyncpa %s14, 0
    loop: start=0, step=1, limit=4
    $region2: #{tpu_custom_call.1} parent=1 // loop_pre_header
      _
    $region3: #{tpu_custom_call.1} parent=1 // loop_header
      %s17 = sphi 0, %s21
      %p18 = scmp.ge.s32.totalorder %s17, 4
      %s24 = sphi 0, %s36
      %s25 = sphi 0, %s32
      %s26 = sphi 0, %s24
      %s27 = sphi 0, %s25
      %s28 = sphi 0, %s26
      %s29 = sphi 0, %s27
      %s41 = sphi 0, %s43
      %s44 = sphi 0, %s41
      %s45 = sphi 0, %s44
      %s61 = sphi 0, %s45
      %s67 = sphi 0, %s69
      %s70 = sphi 0, %s67
      %s71 = sphi 0, %s70
      %s87 = sphi 0, %s71
      %s95 = sphi 0, %s97
      %s98 = sphi 0, %s95
      %s99 = sphi 0, %s98
      %s115 = sphi 0, %s99
    $region4: #{tpu_custom_call.1} parent=1 // loop_header_branch
      %20 = sbr.rel (%p18) target = $region8
    $region5: #{tpu_custom_call.1} parent=1 // loop_body
      %s22 = ssub.s32 %s17, 1
      %s23 = ssub.s32 %s17, 2
      %s30 = sadd.s32 1, %s25
      %p31 = scmp.ge.s32.totalorder %s30, 2
      %s32 = scalar_select %p31, 0, %s30
      %s33 = sadd.s32 1, %s24
      %s34 = scalar_select %p31, %s33, %s24
      %p35 = scmp.ge.s32.totalorder %s34, 1
      %s36 = scalar_select %p35, 0, %s34
      %s37 = ssub.s32 %s24, %s36
      %s38 = ssub.s32 %s25, %s32
      %s39 = sor.u32 %s37, %s38
      %p40 = scmp.eq.s32.totalorder %s39, 0
      %s42 = sadd.s32 %s41, 1
      %s43 = scalar_select %p40, %s41, %s42
      %p46 = pneg %p40
      %p47 = scmp.eq.s32.totalorder %s17, 1
      %p48 = por %p46, %p47
      %p49 = scmp.ne.s32.totalorder %s41, %s44
      %p50 = scmp.eq.s32.totalorder %s17, 0
      %p51 = por %p49, %p50
      %p52 = scmp.ne.s32.totalorder %s41, %s44
      %p53 = scmp.eq.s32.totalorder %s22, 1
      %p54 = por %p52, %p53
      %p55 = scmp.ne.s32.totalorder %s44, %s45
      %p56 = scmp.eq.s32.totalorder %s22, 0
      %p57 = por %p55, %p56
      %p58 = scmp.ne.s32.totalorder %s44, %s45
      %p59 = scmp.eq.s32.totalorder %s23, 1
      %p60 = por %p58, %p59
      %p62 = scmp.ne.s32.totalorder %s45, %s61
      %p63 = scmp.eq.s32.totalorder %s23, 0
      %p64 = por %p62, %p63
      %s65 = ssub.s32 %s25, %s32
      %p66 = scmp.eq.s32.totalorder %s65, 0
      %s68 = sadd.s32 %s67, 1
      %s69 = scalar_select %p66, %s67, %s68
      %p72 = pneg %p66
      %p73 = scmp.eq.s32.totalorder %s17, 1
      %p74 = por %p72, %p73
      %p75 = scmp.ne.s32.totalorder %s67, %s70
      %p76 = scmp.eq.s32.totalorder %s17, 0
      %p77 = por %p75, %p76
      %p78 = scmp.ne.s32.totalorder %s67, %s70
      %p79 = scmp.eq.s32.totalorder %s22, 1
      %p80 = por %p78, %p79
      %p81 = scmp.ne.s32.totalorder %s70, %s71
      %p82 = scmp.eq.s32.totalorder %s22, 0
      %p83 = por %p81, %p82
      %p84 = scmp.ne.s32.totalorder %s70, %s71
      %p85 = scmp.eq.s32.totalorder %s23, 1
      %p86 = por %p84, %p85
      %p88 = scmp.ne.s32.totalorder %s71, %s87
      %p89 = scmp.eq.s32.totalorder %s23, 0
      %p90 = por %p88, %p89
      %s91 = ssub.s32 %s24, %s36
      %s92 = ssub.s32 %s25, %s32
      %s93 = sor.u32 %s91, %s92
      %p94 = scmp.eq.s32.totalorder %s93, 0
      %s96 = sadd.s32 %s95, 1
      %s97 = scalar_select %p94, %s95, %s96
      %p100 = pneg %p94
      %p101 = scmp.eq.s32.totalorder %s17, 1
      %p102 = por %p100, %p101
      %p103 = scmp.ne.s32.totalorder %s95, %s98
      %p104 = scmp.eq.s32.totalorder %s17, 0
      %p105 = por %p103, %p104
      %p106 = scmp.ne.s32.totalorder %s95, %s98
      %p107 = scmp.eq.s32.totalorder %s22, 1
      %p108 = por %p106, %p107
      %p109 = scmp.ne.s32.totalorder %s98, %s99
      %p110 = scmp.eq.s32.totalorder %s22, 0
      %p111 = por %p109, %p110
      %p112 = scmp.ne.s32.totalorder %s98, %s99
      %p113 = scmp.eq.s32.totalorder %s23, 1
      %p114 = por %p112, %p113
      %p116 = scmp.ne.s32.totalorder %s99, %s115
      %p117 = scmp.eq.s32.totalorder %s23, 0
      %p118 = por %p116, %p117
      %p119 = scmp.le.s32.totalorder 1, %s17
      %p120 = scmp.lt.s32.totalorder %s17, 3
      %p121 = pnand %p119, %p120
      %p122 = pneg %p121
      // Predicated region
      $region9: #{tpu_custom_call.1} parent=5 // pred_check
        _
      $region10: #{tpu_custom_call.1} parent=5 // pred_check_branch
        %124 = sbr.rel (%p121) target = $region12
      $region11: #{tpu_custom_call.1} parent=5 // pred_region
        %s125 = ssub.s32 %s17, 1
      $region12: #{tpu_custom_call.1} parent=5 // pred_fallthru
        _
      %p126 = scmp.lt.s32.totalorder %s17, 2
      // Predicated region
      $region13: #{tpu_custom_call.1} parent=5 // pred_check
        %p127 = pneg %p126
      $region14: #{tpu_custom_call.1} parent=5 // pred_check_branch
        %129 = sbr.rel (%p127) target = $region16
      $region15: #{tpu_custom_call.1} parent=5 // pred_region
        // Predicated region
        $region17: #{tpu_custom_call.1} parent=15 // pred_check
          %p130 = pneg %p51
        $region18: #{tpu_custom_call.1} parent=15 // pred_check_branch
          %132 = sbr.rel (%p130) target = $region20
        $region19: #{tpu_custom_call.1} parent=15 // pred_region
          %s133 = sand.u32 %s41, 1
          %s134 = scalar_lea.sflag [#allocation3], %s133
          %s135 = sand.u32 %s41, 1
          %s136 = smul.addr %s135, 8
          %s137 = scalar_lea.vmem [#allocation2], %s136
          %s138 = smul.u32 4, %s25
          %s140 = ssub.s32 128, 128
          %141 = vsyncadd %s134, %s140
          %s142 = smul.addr %s24, 8
          %s143 = sadd.s32 %s138, %s142
          %s144 = smul.addr %s143, 32
          %s145 = scalar_lea.hbm %s0, %s144
          %s147 = sshll.u32 %s137, 4
          %s148 = int_to_ptr.vmem [resolvable:$true] %s147
          %150 = dma.hbm_to_vmem [thread:$0]  %s145, 128, %s148, %s134
        $region20: #{tpu_custom_call.1} parent=15 // pred_fallthru
          _
        // Predicated region
        $region21: #{tpu_custom_call.1} parent=15 // pred_check
          %p151 = pneg %p77
        $region22: #{tpu_custom_call.1} parent=15 // pred_check_branch
          %153 = sbr.rel (%p151) target = $region24
        $region23: #{tpu_custom_call.1} parent=15 // pred_region
          %s154 = sand.u32 %s67, 1
          %s155 = scalar_lea.sflag [#allocation6], %s154
          %s156 = sand.u32 %s67, 1
          %s157 = smul.addr %s156, 8
          %s158 = scalar_lea.vmem [#allocation5], %s157
          %s159 = smul.u32 4, %s25
          %s161 = ssub.s32 128, 128
          %162 = vsyncadd %s155, %s161
          %s163 = smul.addr %s159, 32
          %s164 = scalar_lea.hbm %s1, %s163
          %s166 = sshll.u32 %s158, 4
          %s167 = int_to_ptr.vmem [resolvable:$true] %s166
          %169 = dma.hbm_to_vmem [thread:$0]  %s164, 128, %s167, %s155
        $region24: #{tpu_custom_call.1} parent=15 // pred_fallthru
          _
      $region16: #{tpu_custom_call.1} parent=5 // pred_fallthru
        _
      %p170 = scmp.le.s32.totalorder 1, %s17
      %p171 = scmp.lt.s32.totalorder %s17, 3
      %p172 = pnand %p170, %p171
      %p173 = pneg %p172
      // Predicated region
      $region25: #{tpu_custom_call.1} parent=5 // pred_check
        _
      $region26: #{tpu_custom_call.1} parent=5 // pred_check_branch
        %175 = sbr.rel (%p172) target = $region28
      $region27: #{tpu_custom_call.1} parent=5 // pred_region
        %s176 = ssub.s32 %s17, 1
        %s177 = sand.u32 %s44, 1
        %s178 = scalar_lea.sflag [#allocation3], %s177
        %s179 = sand.u32 %s44, 1
        %s180 = smul.addr %s179, 8
        %s181 = scalar_lea.vmem [#allocation2], %s180
        // Predicated region
        $region29: #{tpu_custom_call.1} parent=27 // pred_check
          %p182 = pneg %p57
        $region30: #{tpu_custom_call.1} parent=27 // pred_check_branch
          %184 = sbr.rel (%p182) target = $region32
        $region31: #{tpu_custom_call.1} parent=27 // pred_region
          %185 = dma.done %s178, 128
        $region32: #{tpu_custom_call.1} parent=27 // pred_fallthru
          _
        %s186 = sand.u32 %s70, 1
        %s187 = scalar_lea.sflag [#allocation6], %s186
        %s188 = sand.u32 %s70, 1
        %s189 = smul.addr %s188, 8
        %s190 = scalar_lea.vmem [#allocation5], %s189
        // Predicated region
        $region33: #{tpu_custom_call.1} parent=27 // pred_check
          %p191 = pneg %p83
        $region34: #{tpu_custom_call.1} parent=27 // pred_check_branch
          %193 = sbr.rel (%p191) target = $region36
        $region35: #{tpu_custom_call.1} parent=27 // pred_region
          %194 = dma.done %s187, 128
        $region36: #{tpu_custom_call.1} parent=27 // pred_fallthru
          _
        %s195 = sand.u32 %s44, 1
        %s196 = scalar_lea.sflag [#allocation3], %s195
        %s197 = sand.u32 %s44, 1
        %s198 = smul.addr %s197, 8
        %s199 = scalar_lea.vmem [#allocation2], %s198
        %p200 = pneg %p57
        %p201 = pneg %p54
        %s202 = sand.u32 %s70, 1
        %s203 = scalar_lea.sflag [#allocation6], %s202
        %s204 = sand.u32 %s70, 1
        %s205 = smul.addr %s204, 8
        %s206 = scalar_lea.vmem [#allocation5], %s205
        %p207 = pneg %p83
        %p208 = pneg %p80
        %p209 = pneg %p111
        %p210 = pneg %p108
        %s211 = sand.u32 %s98, 1
        %s212 = scalar_lea.sflag [#allocation4], %s211
        %s213 = sand.u32 %s98, 1
        %s214 = smul.addr %s213, 8
        %s215 = scalar_lea.vmem [#allocation7], %s214
        %s216 = smul.u32 4, %s27
        %s217 = smul.u32 4, %s27
        %s218 = smul.u32 4, %s27
        %v219 = vld [vmem:[%s181] sm:$0xff]
        %v220 = vld [vmem:[%s190] sm:$0xff]
        %v222 = vlaneseq
        %v223 = vshrl.u32 %v222, 7
        %v224 = vsub.s32 0, %v223
        %v225 = vrot.slane %v220, %v224
        %v226 = vlaneseq
        %v227 = vshrl.u32 %v226, 7
        %v228 = vsub.s32 2, %v227
        %v229 = vrot.slane %v220, %v228
        %v230 = vlaneseq
        %v231 = vshrl.u32 %v230, 7
        %v232 = vsub.s32 4, %v231
        %v233 = vrot.slane %v220, %v232
        %v234 = vlaneseq
        %v235 = vshrl.u32 %v234, 7
        %v236 = vsub.s32 6, %v235
        %v237 = vrot.slane %v220, %v236
        %v242 = vlaneseq
        %v243 = vshrl.u32 %v242, 7
        %v244 = vsub.s32 0, %v243
        %v245 = vrot.slane %v225, %v244
        %v246 = vlaneseq
        %v247 = vshrl.u32 %v246, 7
        %v248 = vsub.s32 0, %v247
        %v249 = vrot.slane %v229, %v248
        %v250 = vlaneseq
        %v251 = vshrl.u32 %v250, 7
        %v252 = vsub.s32 0, %v251
        %v253 = vrot.slane %v233, %v252
        %v254 = vlaneseq
        %v255 = vshrl.u32 %v254, 7
        %v256 = vsub.s32 0, %v255
        %v257 = vrot.slane %v237, %v256
        %v262 = vcombine.low %v245, %v249
        %v263 = vcombine.low %v253, %v257
        %v265 = vunpack.c.l.s4 1983009808
        %v266 = vunpack.c.0.s8 %v265
        %v267 = vlaneseq
        %v268 = vshrl.u32 %v267, 7
        %v269 = vsub.s32 %v266, %v268
        %v270 = vrot.slane %v262, %v269
        %v272 = vunpack.c.l.s4 1983009808
        %v273 = vunpack.c.0.s8 %v272
        %v274 = vlaneseq
        %v275 = vshrl.u32 %v274, 7
        %v276 = vsub.s32 %v273, %v275
        %v277 = vrot.slane %v263, %v276
        %v278 = vcombine.low %v270, %v277
        %v280 = vmul.f32 %v219, %v278
        %v281 = vlaneseq
        %v282 = vshrl.u32 %v281, 7
        %v283 = vsub.s32 1, %v282
        %v284 = vrot.slane %v220, %v283
        %v285 = vlaneseq
        %v286 = vshrl.u32 %v285, 7
        %v287 = vsub.s32 3, %v286
        %v288 = vrot.slane %v220, %v287
        %v289 = vlaneseq
        %v290 = vshrl.u32 %v289, 7
        %v291 = vsub.s32 5, %v290
        %v292 = vrot.slane %v220, %v291
        %v293 = vlaneseq
        %v294 = vshrl.u32 %v293, 7
        %v295 = vsub.s32 7, %v294
        %v296 = vrot.slane %v220, %v295
        %v301 = vlaneseq
        %v302 = vshrl.u32 %v301, 7
        %v303 = vsub.s32 1, %v302
        %v304 = vrot.slane %v284, %v303
        %v305 = vlaneseq
        %v306 = vshrl.u32 %v305, 7
        %v307 = vsub.s32 1, %v306
        %v308 = vrot.slane %v288, %v307
        %v309 = vlaneseq
        %v310 = vshrl.u32 %v309, 7
        %v311 = vsub.s32 1, %v310
        %v312 = vrot.slane %v292, %v311
        %v313 = vlaneseq
        %v314 = vshrl.u32 %v313, 7
        %v315 = vsub.s32 1, %v314
        %v316 = vrot.slane %v296, %v315
        %v321 = vcombine.low %v304, %v308
        %v322 = vcombine.low %v312, %v316
        %v324 = vunpack.c.l.s4 1983009808
        %v325 = vunpack.c.0.s8 %v324
        %v326 = vlaneseq
        %v327 = vshrl.u32 %v326, 7
        %v328 = vsub.s32 %v325, %v327
        %v329 = vrot.slane %v321, %v328
        %v331 = vunpack.c.l.s4 1983009808
        %v332 = vunpack.c.0.s8 %v331
        %v333 = vlaneseq
        %v334 = vshrl.u32 %v333, 7
        %v335 = vsub.s32 %v332, %v334
        %v336 = vrot.slane %v322, %v335
        %v337 = vcombine.low %v329, %v336
        %v339 = vadd.f32 %v280, %v337
        %340 = vst [vmem:[%s215] sm:$0xff] %v339
        %s341 = sand.u32 %s98, 1
        %s342 = scalar_lea.sflag [#allocation4], %s341
        %s343 = sand.u32 %s98, 1
        %s344 = smul.addr %s343, 8
        %s345 = scalar_lea.vmem [#allocation7], %s344
        // Predicated region
        $region37: #{tpu_custom_call.1} parent=27 // pred_check
          %p346 = pneg %p108
        $region38: #{tpu_custom_call.1} parent=27 // pred_check_branch
          %348 = sbr.rel (%p346) target = $region40
        $region39: #{tpu_custom_call.1} parent=27 // pred_region
          %s349 = smul.u32 4, %s27
          %s351 = ssub.s32 128, 128
          %352 = vsyncadd %s342, %s351
          %s353 = smul.addr %s26, 8
          %s354 = sadd.s32 %s349, %s353
          %s355 = smul.addr %s354, 32
          %s356 = scalar_lea.hbm %s2, %s355
          %s358 = sshll.u32 %s345, 4
          %s359 = int_to_ptr.vmem [resolvable:$true] %s358
          %361 = dma.vmem_to_hbm [thread:$0]  %s359, 128, %s356, %s342
        $region40: #{tpu_custom_call.1} parent=27 // pred_fallthru
          _
      $region28: #{tpu_custom_call.1} parent=5 // pred_fallthru
        _
      %p362 = scmp.le.s32.totalorder 2, %s17
      // Predicated region
      $region41: #{tpu_custom_call.1} parent=5 // pred_check
        %p363 = pneg %p362
      $region42: #{tpu_custom_call.1} parent=5 // pred_check_branch
        %365 = sbr.rel (%p363) target = $region44
      $region43: #{tpu_custom_call.1} parent=5 // pred_region
        %s366 = ssub.s32 %s17, 2
        // Predicated region
        $region45: #{tpu_custom_call.1} parent=43 // pred_check
          %p367 = pneg %p114
        $region46: #{tpu_custom_call.1} parent=43 // pred_check_branch
          %369 = sbr.rel (%p367) target = $region48
        $region47: #{tpu_custom_call.1} parent=43 // pred_region
          %s370 = sand.u32 %s99, 1
          %s371 = scalar_lea.sflag [#allocation4], %s370
          %s372 = sand.u32 %s99, 1
          %s373 = smul.addr %s372, 8
          %s374 = scalar_lea.vmem [#allocation7], %s373
          %375 = dma.done %s371, 128
        $region48: #{tpu_custom_call.1} parent=43 // pred_fallthru
          _
      $region44: #{tpu_custom_call.1} parent=5 // pred_fallthru
        _
    $region6: #{tpu_custom_call.1} parent=1 // loop_footer
      %s21 = sadd.s32 1, %s17
    $region7: #{tpu_custom_call.1} parent=1 // loop_footer_branch
      %16 = sbr.rel target = $region3
    $region8: #{tpu_custom_call.1} parent=1 // loop_exit
      _
    %376 = vsyncpa [#allocation3], 1
    %s377 = scalar_lea.sflag [#allocation3], 1
    %378 = vsyncpa %s377, 1
    %379 = vsyncpa [#allocation6], 1
    %s380 = scalar_lea.sflag [#allocation6], 1
    %381 = vsyncpa %s380, 1
    %382 = vsyncpa [#allocation4], 1
    %s383 = scalar_lea.sflag [#allocation4], 1
    %384 = vsyncpa %s383, 1

</llo_original>
